<compile_context>
chip_gen: v5e
topology: v5e:2x2
jax: 0.10.0
libtpu: 0.0.40
codegen_flags: <defaults>
</compile_context>

<pallas_src>
import jax
import jax.numpy as jnp
from jax.experimental import pallas as pl
from jax.experimental.pallas import tpu as pltpu


# ----------------------------------------------------------------------------
# Pallas kernel: single HBM -> HBM DMA (no grid, no VMEM staging).
# ----------------------------------------------------------------------------
def _dma_copy_kernel(x_hbm, o_hbm, sem):
    cp = pltpu.make_async_copy(x_hbm, o_hbm, sem)
    cp.start()
    cp.wait()


# Inputs smaller than this are copied with plain XLA (fixed pallas_call setup
# overhead dominates sub-microsecond transfers on every TPU generation).
_MIN_PALLAS_BYTES = 1 << 20  # 1 MiB


def copy_latent_pallas(features, *, min_pallas_bytes=_MIN_PALLAS_BYTES):
    """Materialize a distinct copy of `features`.

    Large inputs: one Pallas HBM->HBM DMA (1 read + 1 write, HBM roofline).
    Small inputs (< min_pallas_bytes): plain XLA copy — cheaper than the fixed
    pallas_call overhead.
    """
    itemsize = jnp.dtype(features.dtype).itemsize
    nbytes = features.size * itemsize

    if nbytes < min_pallas_bytes:
        # Size guard: tiny transfer, skip Pallas entirely.
        return jnp.copy(features)

    return pl.pallas_call(
        _dma_copy_kernel,
        out_shape=jax.ShapeDtypeStruct(features.shape, features.dtype),
        in_specs=[pl.BlockSpec(memory_space=pl.ANY)],
        out_specs=pl.BlockSpec(memory_space=pl.ANY),
        scratch_shapes=[pltpu.SemaphoreType.DMA(())],
        cost_estimate=pl.CostEstimate(
            flops=0,
            transcendentals=0,
            bytes_accessed=2 * nbytes,  # 1 read + 1 write
        ),
    )(features)


# ----------------------------------------------------------------------------
# Module-equivalent API
# ----------------------------------------------------------------------------
def custom_mlp_extractor_forward(features, *, materialize=False,
                                 min_pallas_bytes=_MIN_PALLAS_BYTES):
    """Pass-through: returns (actor_latent, critic_latent).

    Default (materialize=False): zero-cost — returns the same array twice,
    exactly like the PyTorch module returns the same tensor twice.

    materialize=True: actor latent still aliases the input (zero extra HBM
    traffic); critic latent is a distinct buffer produced by the single-DMA
    Pallas copy (or a plain XLA copy for tiny inputs).
    """
    if not materialize:
        return features, features
    return features, copy_latent_pallas(features,
                                         min_pallas_bytes=min_pallas_bytes)


def custom_mlp_extractor_forward_actor(features):
    # Dedicated single-output path: no kernel, no discarded output.
    return features


def custom_mlp_extractor_forward_critic(features):
    return features


# ----------------------------------------------------------------------------
# Demo / self-test
# ----------------------------------------------------------------------------
if __name__ == "__main__":
    latent_dim = 128
    batch = 32

    key = jax.random.PRNGKey(0)
    features = jax.random.normal(key, (batch, latent_dim), dtype=jnp.float32)

    # Fast path (recommended): no kernel, shared storage like PyTorch.
    a_fast, c_fast = custom_mlp_extractor_forward(features)
    assert a_fast is features and c_fast is features

    # Force the Pallas HBM->HBM DMA path even at this small demo size
    # (min_pallas_bytes=0), so the kernel is actually exercised on TPU.
    a_lat, c_lat = custom_mlp_extractor_forward(features, materialize=True,
                                                min_pallas_bytes=0)
    jax.block_until_ready((a_lat, c_lat))

    assert a_lat.shape == features.shape and c_lat.shape == features.shape
    assert a_lat.dtype == features.dtype and c_lat.dtype == features.dtype
    assert bool(jnp.all(a_lat == features))
    assert bool(jnp.all(c_lat == features))

    # Ragged batch (not a multiple of 8/128): whole-array DMA is shape-agnostic.
    ragged = jax.random.normal(jax.random.PRNGKey(0), (20, latent_dim),
                               dtype=jnp.float32)
    ragged_copy = copy_latent_pallas(ragged, min_pallas_bytes=0)
    jax.block_until_ready(ragged_copy)
    assert bool(jnp.all(ragged_copy == ragged))

    # Default size guard: tiny input takes the plain-XLA copy path and still
    # produces a correct, distinct buffer.
    _, c_small = custom_mlp_extractor_forward(features, materialize=True)
    jax.block_until_ready(c_small)
    assert bool(jnp.all(c_small == features))

    # Single-output paths are pure pass-through (no wasted kernel output).
    assert custom_mlp_extractor_forward_actor(features) is features
    assert custom_mlp_extractor_forward_critic(features) is features

    print("KERNEL_OK")
</pallas_src>

<mosaic_0001>
module attributes {stable_mosaic.version = 11 : i64} {
  func.func @_dma_copy_kernel(%arg0: memref<32x128xf32, #tpu.memory_space<any>>, %arg1: memref<32x128xf32, #tpu.memory_space<any>>, %arg2: memref<!tpu.dma_semaphore, #tpu.memory_space<semaphore_mem>>) attributes {dimension_semantics = [], scalar_prefetch = 0 : i64, scratch_operands = 1 : i64, tpu.core_type = #tpu.core_type<tc>} {
    tpu.enqueue_dma source(%arg0 : memref<32x128xf32, #tpu.memory_space<any>>) target(%arg1 : memref<32x128xf32, #tpu.memory_space<any>>) target_semaphore(%arg2 : memref<!tpu.dma_semaphore, #tpu.memory_space<semaphore_mem>>)
    tpu.wait_dma2 semaphore(%arg2 : memref<!tpu.dma_semaphore, #tpu.memory_space<semaphore_mem>>) src(%arg0 : memref<32x128xf32, #tpu.memory_space<any>>) dst(%arg1 : memref<32x128xf32, #tpu.memory_space<any>>)
    return
  }
}

</mosaic_0001>

<llo_original>
// kernel: tpu_custom_call.1
$region0: #{tpu_custom_call.1}
  #allocation0 [shape = 'u32[]', space=smem, size = 0x4, offset = 0x4, fixed_abs, tag = 'smem constant byte address 0x4 - core index']
  #allocation1 [shape = 'u32[72,128]{1,0:T(1,128)}', space=vmem, size = 0x9000, scoped, tag = 'internal scratch']
  #allocation2 [shape = 's32[1]{0}', space=sflag, size = 0x4, scoped, tag = 'scratch operand']
  #allocation3 [shape = 's32[]', space=sflag, size = 0x4, offset = 0, fixed_abs, tag = 'sflag constant byte address 0x0 - dummy sync flag']
  #allocation4 [shape = 'u32[0]{0}', space=smem, size = 0, offset = 0, fixed_abs, tag = 'smem constant byte address 0x0 - null']
  %s0 = inlined_call_operand.hbm [shape: f32[32,128], index: 0, kind: input, shape index: {}]
  %s1 = inlined_call_operand.hbm [shape: f32[32,128], index: 1, kind: output, shape index: {}]
  %s2 = sld [smem:[#allocation0]]
  $region2: #{tpu_custom_call.1} parent=0
    _
  %s4 = ssub.s32 1, %s2
  %s5 = scalar_select 0, %s4, %s2
  %s7 = sshll.u32 1, 14
  %s8 = sxor.u32 4294967295, %s7
  %s10 = sshll.u32 %s0, 4
  %s11 = int_to_ptr.hbm [resolvable:$true] %s10
  %s12 = sshll.u32 %s1, 4
  %s13 = int_to_ptr.hbm [resolvable:$true] %s12
  %16 = dma.general %s11, 512, %s13, [#allocation2], [#allocation3], [#allocation4], 0, 0
  %s17 = smul.u32 32, 1
  %s18 = sshll.u32 %s17, 4
  %19 = dma.done [#allocation2], %s18
  %20 = vsyncmov [#allocation2]
  %s21 = vpop.sfrf %20
  %p22 = scmp.eq.s32.totalorder %s21, 0
  %p23 = pneg %p22
  %25 = shalt.err (%p23)

</llo_original>
